<compile_context>
chip_gen: v6e
topology: v6e:2x2x1
jax: 0.10.0
libtpu: 0.0.40
codegen_flags: <defaults>
</compile_context>

<pallas_src>
import functools

import jax
import jax.numpy as jnp
from jax.experimental import pallas as pl
from jax.experimental.pallas import tpu as pltpu

LANE = 128  # TPU vreg lane width; all minor dims are padded to a multiple of this


def _round_up(v, m):
    return (v + m - 1) // m * m


def _pad_to(arr, shape):
    pads = [(0, t - s) for s, t in zip(arr.shape, shape)]
    return jnp.pad(arr, pads)


def _fused_graphsage_kernel(fp, hp, a_ref, x_ref, w1_ref, b1_ref, w2_ref,
                            b2_ref, o_ref, cat_ref):
    """Fused 2-layer SAGEConv forward.

    Per layer:  out = [A @ X | X] @ [W_l ; W_r] + b   (one K=2*F MXU push)
    The [agg | x] operand is staged in the persistent `cat_ref` scratch: the
    right half is written once per layer (X, then h), the left half receives
    the cast aggregation directly — no jnp.concatenate temporary.
    All matmuls: bf16 operands, f32 MXU accumulation.
    """
    a = a_ref[...]                                   # [NP, NP] bf16 row-norm adjacency
    x = x_ref[...]                                   # [NP, FP] bf16 node features

    # ---- layer 1: SAGEConv(in -> hidden) + ReLU ---------------------------
    cat_ref[:, pl.ds(fp, fp)] = x                    # right half: X (copied once)
    agg1 = jnp.dot(a, x, preferred_element_type=jnp.float32)      # mean-neigh
    cat_ref[:, pl.ds(0, fp)] = agg1.astype(jnp.bfloat16)          # left half
    z1 = jnp.dot(cat_ref[:, pl.ds(0, 2 * fp)], w1_ref[...],
                 preferred_element_type=jnp.float32) + b1_ref[...]
    h = jnp.maximum(z1, 0.0).astype(jnp.bfloat16)    # value; no dedicated h scratch
    # F.dropout(..., training=False) == identity (eval mode).

    # ---- layer 2: SAGEConv(hidden -> out) ---------------------------------
    agg2 = jnp.dot(a, h, preferred_element_type=jnp.float32)
    cat_ref[:, pl.ds(0, hp)] = agg2.astype(jnp.bfloat16)
    cat_ref[:, pl.ds(hp, hp)] = h                    # staging write for fused dot
    z2 = jnp.dot(cat_ref[:, pl.ds(0, 2 * hp)], w2_ref[...],
                 preferred_element_type=jnp.float32) + b2_ref[...]
    o_ref[...] = z2.astype(o_ref.dtype)              # bf16 lane-dense store


def _vmem_limit_bytes(resident_bytes):
    """Scoped-VMEM request from the queried physical capacity (no 2x factor:
    nothing is double-buffered at grid=())."""
    try:
        cap = int(getattr(pltpu.get_tpu_info(), "vmem_capacity_bytes", 0) or 0)
    except Exception:  # pragma: no cover - defensive (emulator / AOT on CPU)
        cap = 0
    if cap <= 0:
        cap = 64 << 20  # conservative: v7x physical VMEM per TensorCore
    want = resident_bytes + (16 << 20)               # compiler-scratch headroom
    return int(min(cap - (8 << 20), max(32 << 20, want)))


def fused_graphsage(a_p, x_p, w1_cat, b1_p, w2_cat, b2_p):
    """Single pallas_call; whole (padded) problem is VMEM-resident, grid=()."""
    np_, fp = x_p.shape
    hp = w1_cat.shape[1]
    op = w2_cat.shape[1]
    cat_w = 2 * max(fp, hp)                          # persistent [agg | x/h] staging
    resident = (
        a_p.size * 2 + x_p.size * 2                  # bf16 A, X
        + w1_cat.size * 2 + w2_cat.size * 2          # bf16 weights
        + (hp + op) * 4                              # f32 biases
        + np_ * cat_w * 2                            # bf16 concat-staging scratch
        + np_ * op * 2                               # bf16 output
    )
    kernel = functools.partial(_fused_graphsage_kernel, fp, hp)
    return pl.pallas_call(
        kernel,
        out_shape=jax.ShapeDtypeStruct((np_, op), jnp.bfloat16),
        in_specs=[
            pl.BlockSpec(a_p.shape, lambda: (0, 0)),
            pl.BlockSpec(x_p.shape, lambda: (0, 0)),
            pl.BlockSpec(w1_cat.shape, lambda: (0, 0)),
            pl.BlockSpec(b1_p.shape, lambda: (0, 0)),
            pl.BlockSpec(w2_cat.shape, lambda: (0, 0)),
            pl.BlockSpec(b2_p.shape, lambda: (0, 0)),
        ],
        out_specs=pl.BlockSpec((np_, op), lambda: (0, 0)),
        scratch_shapes=[pltpu.VMEM((np_, cat_w), jnp.bfloat16)],
        compiler_params=pltpu.CompilerParams(
            vmem_limit_bytes=_vmem_limit_bytes(resident)),
    )(a_p, x_p, w1_cat, b1_p, w2_cat, b2_p)


# ---- one-time (per graph / per params) prep: hoisted out of the forward ----

def prepare_graph(edge_index, num_nodes):
    """Dense row-normalized adjacency scattered directly into the padded
    (NP, NP) buffer and cast to bf16. Built ONCE per graph and cached."""
    np_ = _round_up(num_nodes, LANE)
    src, dst = edge_index[0], edge_index[1]
    a = jnp.zeros((np_, np_), jnp.float32).at[dst, src].add(1.0)
    deg = a.sum(axis=1, keepdims=True)
    return (a / jnp.maximum(deg, 1.0)).astype(jnp.bfloat16)


def prepare_params(params):
    """Pad, concat ([W_l ; W_r]) and bf16-cast the weights ONCE at init time."""
    f_in, hid = params["w1_l"].shape
    out = params["w2_l"].shape[1]
    fp, hp, op = (_round_up(v, LANE) for v in (f_in, hid, out))
    w1_cat = jnp.concatenate(
        [_pad_to(params["w1_l"], (fp, hp)), _pad_to(params["w1_r"], (fp, hp))],
        axis=0).astype(jnp.bfloat16)                 # [2*FP, HP]
    w2_cat = jnp.concatenate(
        [_pad_to(params["w2_l"], (hp, op)), _pad_to(params["w2_r"], (hp, op))],
        axis=0).astype(jnp.bfloat16)                 # [2*HP, OP]
    b1_p = _pad_to(params["b1_l"], (1, hp)).astype(jnp.float32)
    b2_p = _pad_to(params["b2_l"], (1, op)).astype(jnp.float32)
    return {"w1_cat": w1_cat, "b1": b1_p, "w2_cat": w2_cat, "b2": b2_p}


@functools.partial(jax.jit, static_argnames=("out_channels",))
def graphsage_forward(x, a_p, w1_cat, b1_p, w2_cat, b2_p, *, out_channels):
    """Per-call forward: only pads/casts X and launches the fused kernel."""
    n = x.shape[0]
    np_ = a_p.shape[0]
    fp = w1_cat.shape[0] // 2
    x_p = _pad_to(x, (np_, fp)).astype(jnp.bfloat16)
    out_p = fused_graphsage(a_p, x_p, w1_cat, b1_p, w2_cat, b2_p)
    return out_p[:n, :out_channels].astype(jnp.float32)


def glorot(key, shape):
    fan_in, fan_out = shape
    limit = jnp.sqrt(6.0 / (fan_in + fan_out))
    return jax.random.uniform(key, shape, jnp.float32, -limit, limit)


if __name__ == "__main__":
    # Small synthetic graph: 64 nodes, 256 edges, in=16, hidden=32, out=8 classes.
    N, E = 64, 256
    IN_C, HID_C, OUT_C = 16, 32, 8

    key = jax.random.PRNGKey(0)
    kx, ke_src, ke_dst, k1, k2, k3, k4, kb1, kb2 = jax.random.split(key, 9)

    x = jax.random.normal(kx, (N, IN_C), jnp.float32)
    edge_index = jnp.stack(
        [
            jax.random.randint(ke_src, (E,), 0, N, jnp.int32),
            jax.random.randint(ke_dst, (E,), 0, N, jnp.int32),
        ],
        axis=0,
    )  # [2, E]

    # Weights stored as (in, out): kernel computes x @ W (== PyG's x @ W^T).
    params = {
        "w1_l": glorot(k1, (IN_C, HID_C)),
        "w1_r": glorot(k2, (IN_C, HID_C)),
        "b1_l": 0.1 * jax.random.normal(kb1, (1, HID_C), jnp.float32),
        "w2_l": glorot(k3, (HID_C, OUT_C)),
        "w2_r": glorot(k4, (HID_C, OUT_C)),
        "b2_l": 0.1 * jax.random.normal(kb2, (1, OUT_C), jnp.float32),
    }

    # One-time prep (hoisted out of the jitted forward).
    a_p = jax.block_until_ready(prepare_graph(edge_index, N))
    prep = {k: jax.block_until_ready(v) for k, v in prepare_params(params).items()}

    logits = graphsage_forward(x, a_p, prep["w1_cat"], prep["b1"],
                               prep["w2_cat"], prep["b2"], out_channels=OUT_C)
    jax.block_until_ready(logits)
    assert logits.shape == (N, OUT_C)

    # --- Pure-JAX references -------------------------------------------------
    a_f32 = jnp.zeros((N, N), jnp.float32).at[edge_index[1], edge_index[0]].add(1.0)
    a_f32 = a_f32 / jnp.maximum(a_f32.sum(axis=1, keepdims=True), 1.0)

    # (1) bf16-simulated reference (same roundings as the kernel) — tight check.
    def _q(v):
        return v.astype(jnp.bfloat16).astype(jnp.float32)

    a_q, x_q = _q(a_f32), _q(x)
    agg1_q = _q(a_q @ x_q)
    h_q = _q(jnp.maximum(
        agg1_q @ _q(params["w1_l"]) + x_q @ _q(params["w1_r"]) + params["b1_l"],
        0.0))
    agg2_q = _q(a_q @ h_q)
    ref_q = _q(agg2_q @ _q(params["w2_l"]) + h_q @ _q(params["w2_r"])
               + params["b2_l"])
    assert jnp.allclose(logits, ref_q, atol=2e-2, rtol=2e-2), (
        float(jnp.max(jnp.abs(logits - ref_q))))

    # (2) full-precision f32 reference (original module semantics) — loose check
    #     (bf16 operand/output tolerance).
    h_ref = jnp.maximum(
        a_f32 @ x @ params["w1_l"] + x @ params["w1_r"] + params["b1_l"], 0.0)
    ref_f32 = (a_f32 @ h_ref @ params["w2_l"] + h_ref @ params["w2_r"]
               + params["b2_l"])
    assert jnp.allclose(logits, ref_f32, atol=7.5e-2, rtol=7.5e-2), (
        float(jnp.max(jnp.abs(logits - ref_f32))))

    print("KERNEL_OK")
</pallas_src>

<mosaic_0001>
module attributes {stable_mosaic.version = 11 : i64} {
  func.func @_fused_graphsage_kernel(%arg0: memref<128x128xbf16, #tpu.memory_space<vmem>>, %arg1: memref<128x128xbf16, #tpu.memory_space<vmem>>, %arg2: memref<256x128xbf16, #tpu.memory_space<vmem>>, %arg3: memref<1x128xf32, #tpu.memory_space<vmem>>, %arg4: memref<256x128xbf16, #tpu.memory_space<vmem>>, %arg5: memref<1x128xf32, #tpu.memory_space<vmem>>, %arg6: memref<128x128xbf16, #tpu.memory_space<vmem>>, %arg7: memref<128x256xbf16, #tpu.memory_space<vmem>>) attributes {dimension_semantics = [], scalar_prefetch = 0 : i64, scratch_operands = 1 : i64, tpu.core_type = #tpu.core_type<tc>} {
    %c0 = arith.constant 0 : index
    %c0_0 = arith.constant 0 : index
    %0 = vector.load %arg0[%c0, %c0_0] : memref<128x128xbf16, #tpu.memory_space<vmem>>, vector<128x128xbf16>
    %c0_1 = arith.constant 0 : index
    %c0_2 = arith.constant 0 : index
    %1 = vector.load %arg1[%c0_1, %c0_2] : memref<128x128xbf16, #tpu.memory_space<vmem>>, vector<128x128xbf16>
    %c0_3 = arith.constant 0 : index
    %c128 = arith.constant 128 : index
    %2 = vector.load %arg7[%c0_3, %c128] : memref<128x256xbf16, #tpu.memory_space<vmem>>, vector<128x128xbf16>
    tpu.vector_store %arg7[%c0_3, %c128], %1 {strides = array<i32>} : memref<128x256xbf16, #tpu.memory_space<vmem>>, vector<128x128xbf16>,
    %cst = arith.constant dense<0.000000e+00> : vector<128x128xf32>
    %3 = tpu.matmul %0, %1, %cst {dimension_numbers = #tpu.dot_dimension_numbers<[1], [0], [0], [1], [0, 0, 1, 1], [], []>} : vector<128x128xbf16>, vector<128x128xbf16>, vector<128x128xf32> -> vector<128x128xf32>
    %4 = arith.truncf %3 : vector<128x128xf32> to vector<128x128xbf16>
    %c0_4 = arith.constant 0 : index
    %c0_5 = arith.constant 0 : index
    %5 = vector.load %arg7[%c0_4, %c0_5] : memref<128x256xbf16, #tpu.memory_space<vmem>>, vector<128x128xbf16>
    tpu.vector_store %arg7[%c0_4, %c0_5], %4 {strides = array<i32>} : memref<128x256xbf16, #tpu.memory_space<vmem>>, vector<128x128xbf16>,
    %c0_6 = arith.constant 0 : index
    %c0_7 = arith.constant 0 : index
    %6 = vector.load %arg7[%c0_6, %c0_7] : memref<128x256xbf16, #tpu.memory_space<vmem>>, vector<128x256xbf16>
    %c0_8 = arith.constant 0 : index
    %c0_9 = arith.constant 0 : index
    %7 = vector.load %arg2[%c0_8, %c0_9] : memref<256x128xbf16, #tpu.memory_space<vmem>>, vector<256x128xbf16>
    %cst_10 = arith.constant dense<0.000000e+00> : vector<128x128xf32>
    %8 = tpu.matmul %6, %7, %cst_10 {dimension_numbers = #tpu.dot_dimension_numbers<[1], [0], [0], [1], [0, 0, 1, 1], [], []>} : vector<128x256xbf16>, vector<256x128xbf16>, vector<128x128xf32> -> vector<128x128xf32>
    %c0_11 = arith.constant 0 : index
    %c0_12 = arith.constant 0 : index
    %9 = vector.load %arg3[%c0_11, %c0_12] : memref<1x128xf32, #tpu.memory_space<vmem>>, vector<1x128xf32>
    %10 = vector.broadcast %9 : vector<1x128xf32> to vector<128x128xf32>
    %11 = arith.addf %8, %10 : vector<128x128xf32>
    %cst_13 = arith.constant 0.000000e+00 : f32
    %12 = vector.broadcast %cst_13 : f32 to vector<128x128xf32>
    %13 = arith.maximumf %11, %12 : vector<128x128xf32>
    %14 = arith.truncf %13 : vector<128x128xf32> to vector<128x128xbf16>
    %cst_14 = arith.constant dense<0.000000e+00> : vector<128x128xf32>
    %15 = tpu.matmul %0, %14, %cst_14 {dimension_numbers = #tpu.dot_dimension_numbers<[1], [0], [0], [1], [0, 0, 1, 1], [], []>} : vector<128x128xbf16>, vector<128x128xbf16>, vector<128x128xf32> -> vector<128x128xf32>
    %16 = arith.truncf %15 : vector<128x128xf32> to vector<128x128xbf16>
    %c0_15 = arith.constant 0 : index
    %c0_16 = arith.constant 0 : index
    %17 = vector.load %arg7[%c0_15, %c0_16] : memref<128x256xbf16, #tpu.memory_space<vmem>>, vector<128x128xbf16>
    tpu.vector_store %arg7[%c0_15, %c0_16], %16 {strides = array<i32>} : memref<128x256xbf16, #tpu.memory_space<vmem>>, vector<128x128xbf16>,
    %c0_17 = arith.constant 0 : index
    %c128_18 = arith.constant 128 : index
    %18 = vector.load %arg7[%c0_17, %c128_18] : memref<128x256xbf16, #tpu.memory_space<vmem>>, vector<128x128xbf16>
    tpu.vector_store %arg7[%c0_17, %c128_18], %14 {strides = array<i32>} : memref<128x256xbf16, #tpu.memory_space<vmem>>, vector<128x128xbf16>,
    %c0_19 = arith.constant 0 : index
    %c0_20 = arith.constant 0 : index
    %19 = vector.load %arg7[%c0_19, %c0_20] : memref<128x256xbf16, #tpu.memory_space<vmem>>, vector<128x256xbf16>
    %c0_21 = arith.constant 0 : index
    %c0_22 = arith.constant 0 : index
    %20 = vector.load %arg4[%c0_21, %c0_22] : memref<256x128xbf16, #tpu.memory_space<vmem>>, vector<256x128xbf16>
    %cst_23 = arith.constant dense<0.000000e+00> : vector<128x128xf32>
    %21 = tpu.matmul %19, %20, %cst_23 {dimension_numbers = #tpu.dot_dimension_numbers<[1], [0], [0], [1], [0, 0, 1, 1], [], []>} : vector<128x256xbf16>, vector<256x128xbf16>, vector<128x128xf32> -> vector<128x128xf32>
    %c0_24 = arith.constant 0 : index
    %c0_25 = arith.constant 0 : index
    %22 = vector.load %arg5[%c0_24, %c0_25] : memref<1x128xf32, #tpu.memory_space<vmem>>, vector<1x128xf32>
    %23 = vector.broadcast %22 : vector<1x128xf32> to vector<128x128xf32>
    %24 = arith.addf %21, %23 : vector<128x128xf32>
    %25 = arith.truncf %24 : vector<128x128xf32> to vector<128x128xbf16>
    %c0_26 = arith.constant 0 : index
    %c0_27 = arith.constant 0 : index
    %26 = vector.load %arg6[%c0_26, %c0_27] : memref<128x128xbf16, #tpu.memory_space<vmem>>, vector<128x128xbf16>
    tpu.vector_store %arg6[%c0_26, %c0_27], %25 {strides = array<i32>} : memref<128x128xbf16, #tpu.memory_space<vmem>>, vector<128x128xbf16>,
    return
  }
}

</mosaic_0001>

<llo_original>
// kernel: graphsage_forward.1
$region0: #{graphsage_forward.1}
  #allocation0 [shape = 'u32[]', space=smem, size = 0x4, offset = 0x4, fixed_abs, tag = 'smem constant byte address 0x4 - core index']
  #allocation1 [shape = 'u32[144,128]{1,0:T(1,128)}', space=vmem, size = 0x12000, scoped, tag = 'internal scratch']
  #allocation2 [shape = 'bf16[128,256]{1,0:T(8,128)(2,1)}', space=vmem, size = 0x10000, scoped, tag = 'scratch operand']
  %s0 = inlined_call_operand.hbm [shape: bf16[128,128], index: 0, kind: input, shape index: {}]
  %s1 = inlined_call_operand.vmem [shape: bf16[128,128], index: 1, kind: input, shape index: {}]
  %s2 = inlined_call_operand.vmem [shape: bf16[256,128], index: 2, kind: input, shape index: {}]
  %s3 = inlined_call_operand.vmem [shape: f32[1,128], index: 3, kind: input, shape index: {}]
  %s4 = inlined_call_operand.hbm [shape: bf16[256,128], index: 4, kind: input, shape index: {}]
  %s5 = inlined_call_operand.vmem [shape: f32[1,128], index: 5, kind: input, shape index: {}]
  %s6 = inlined_call_operand.vmem [shape: bf16[128,128], index: 6, kind: output, shape index: {}]
  %s7 = sld [smem:[#allocation0]]
  $region42: #{graphsage_forward.1} parent=0
    _
  %s9 = ssub.s32 1, %s7
  %s10 = scalar_select 0, %s9, %s7
  $region1: #{graphsage_forward.1} parent=0
    #allocation3 [shape = 'u8[32768]{0}', space=vmem, size = 0x8000, scoped, tag = 'input window, operand 0, single buffered']
    #allocation4 [shape = 's32[1]{0}', space=sflag, size = 0x4, scoped, tag = 'scoped memory for graphsage_forward.1']
    #allocation5 [shape = 'u8[65536]{0}', space=vmem, size = 0x10000, scoped, tag = 'input window, operand 4, single buffered']
    #allocation6 [shape = 's32[1]{0}', space=sflag, size = 0x4, scoped, tag = 'scoped memory for graphsage_forward.1']
    %11 = vsyncpa [#allocation4], 0
    %12 = vsyncpa [#allocation6], 0
    // Predicated region
    $region2: #{graphsage_forward.1} parent=1 // pred_check
      _
    $region3: #{graphsage_forward.1} parent=1 // pred_check_branch
      %14 = sbr.rel (0) target = $region5
    $region4: #{graphsage_forward.1} parent=1 // pred_region
      %s16 = ssub.s32 1024, 1024
      %17 = vsyncadd [#allocation4], %s16
      %s18 = sshll.u32 [#allocation3], 4
      %s19 = int_to_ptr.vmem [resolvable:$true] %s18
      %24 = dma.hbm_to_vmem [thread:$0]  %s0, 1024, %s19, [#allocation4], 64, 64, 4
    $region5: #{graphsage_forward.1} parent=1 // pred_fallthru
      _
    // Predicated region
    $region6: #{graphsage_forward.1} parent=1 // pred_check
      _
    $region7: #{graphsage_forward.1} parent=1 // pred_check_branch
      %26 = sbr.rel (0) target = $region9
    $region8: #{graphsage_forward.1} parent=1 // pred_region
      _
    $region9: #{graphsage_forward.1} parent=1 // pred_fallthru
      _
    // Predicated region
    $region10: #{graphsage_forward.1} parent=1 // pred_check
      _
    $region11: #{graphsage_forward.1} parent=1 // pred_check_branch
      %28 = sbr.rel (0) target = $region13
    $region12: #{graphsage_forward.1} parent=1 // pred_region
      _
    $region13: #{graphsage_forward.1} parent=1 // pred_fallthru
      _
    // Predicated region
    $region14: #{graphsage_forward.1} parent=1 // pred_check
      _
    $region15: #{graphsage_forward.1} parent=1 // pred_check_branch
      %30 = sbr.rel (0) target = $region17
    $region16: #{graphsage_forward.1} parent=1 // pred_region
      _
    $region17: #{graphsage_forward.1} parent=1 // pred_fallthru
      _
    // Predicated region
    $region18: #{graphsage_forward.1} parent=1 // pred_check
      _
    $region19: #{graphsage_forward.1} parent=1 // pred_check_branch
      %32 = sbr.rel (0) target = $region21
    $region20: #{graphsage_forward.1} parent=1 // pred_region
      %s34 = ssub.s32 2048, 2048
      %35 = vsyncadd [#allocation6], %s34
      %s36 = sshll.u32 [#allocation5], 4
      %s37 = int_to_ptr.vmem [resolvable:$true] %s36
      %42 = dma.hbm_to_vmem [thread:$0]  %s4, 2048, %s37, [#allocation6], 64, 64, 4
    $region21: #{graphsage_forward.1} parent=1 // pred_fallthru
      _
    // Predicated region
    $region22: #{graphsage_forward.1} parent=1 // pred_check
      _
    $region23: #{graphsage_forward.1} parent=1 // pred_check_branch
      %44 = sbr.rel (0) target = $region25
    $region24: #{graphsage_forward.1} parent=1 // pred_region
      _
    $region25: #{graphsage_forward.1} parent=1 // pred_fallthru
      _
    // Predicated region
    $region26: #{graphsage_forward.1} parent=1 // pred_check
      _
    $region27: #{graphsage_forward.1} parent=1 // pred_check_branch
      %46 = sbr.rel (0) target = $region29
    $region28: #{graphsage_forward.1} parent=1 // pred_region
      %47 = dma.done [#allocation4], 1024
    $region29: #{graphsage_forward.1} parent=1 // pred_fallthru
      _
    // Predicated region
    $region30: #{graphsage_forward.1} parent=1 // pred_check
      _
    $region31: #{graphsage_forward.1} parent=1 // pred_check_branch
      %49 = sbr.rel (0) target = $region33
    $region32: #{graphsage_forward.1} parent=1 // pred_region
      %50 = dma.done [#allocation6], 2048
    $region33: #{graphsage_forward.1} parent=1 // pred_fallthru
      _
    %v52 = vld [vmem:[#allocation3] sm:$0xf]
    %v53 = vld [vmem:[#allocation3 + $0x4] sm:$0xf]
    %v54 = vld [vmem:[#allocation3 + $0x8] sm:$0xf]
    %v55 = vld [vmem:[#allocation3 + $0xc] sm:$0xf]
    %v56 = vld [vmem:[#allocation3 + $0x10] sm:$0xf]
    %v57 = vld [vmem:[#allocation3 + $0x14] sm:$0xf]
    %v58 = vld [vmem:[#allocation3 + $0x18] sm:$0xf]
    %v59 = vld [vmem:[#allocation3 + $0x1c] sm:$0xf]
    %v60 = vld [vmem:[#allocation3 + $0x20] sm:$0xf]
    %v61 = vld [vmem:[#allocation3 + $0x24] sm:$0xf]
    %v62 = vld [vmem:[#allocation3 + $0x28] sm:$0xf]
    %v63 = vld [vmem:[#allocation3 + $0x2c] sm:$0xf]
    %v64 = vld [vmem:[#allocation3 + $0x30] sm:$0xf]
    %v65 = vld [vmem:[#allocation3 + $0x34] sm:$0xf]
    %v66 = vld [vmem:[#allocation3 + $0x38] sm:$0xf]
    %v67 = vld [vmem:[#allocation3 + $0x3c] sm:$0xf]
    %v68 = vld [vmem:[%s1] sm:$0xf]
    %v69 = vld [vmem:[%s1 + $0x4] sm:$0xf]
    %v70 = vld [vmem:[%s1 + $0x8] sm:$0xf]
    %v71 = vld [vmem:[%s1 + $0xc] sm:$0xf]
    %v72 = vld [vmem:[%s1 + $0x10] sm:$0xf]
    %v73 = vld [vmem:[%s1 + $0x14] sm:$0xf]
    %v74 = vld [vmem:[%s1 + $0x18] sm:$0xf]
    %v75 = vld [vmem:[%s1 + $0x1c] sm:$0xf]
    %v76 = vld [vmem:[%s1 + $0x20] sm:$0xf]
    %v77 = vld [vmem:[%s1 + $0x24] sm:$0xf]
    %v78 = vld [vmem:[%s1 + $0x28] sm:$0xf]
    %v79 = vld [vmem:[%s1 + $0x2c] sm:$0xf]
    %v80 = vld [vmem:[%s1 + $0x30] sm:$0xf]
    %v81 = vld [vmem:[%s1 + $0x34] sm:$0xf]
    %v82 = vld [vmem:[%s1 + $0x38] sm:$0xf]
    %v83 = vld [vmem:[%s1 + $0x3c] sm:$0xf]
    %84 = vst [vmem:[#allocation2 + $0x4] sm:$0xf] %v68
    %85 = vst [vmem:[#allocation2 + $0xc] sm:$0xf] %v69
    %86 = vst [vmem:[#allocation2 + $0x14] sm:$0xf] %v70
    %87 = vst [vmem:[#allocation2 + $0x1c] sm:$0xf] %v71
    %88 = vst [vmem:[#allocation2 + $0x24] sm:$0xf] %v72
    %89 = vst [vmem:[#allocation2 + $0x2c] sm:$0xf] %v73
    %90 = vst [vmem:[#allocation2 + $0x34] sm:$0xf] %v74
    %91 = vst [vmem:[#allocation2 + $0x3c] sm:$0xf] %v75
    %92 = vst [vmem:[#allocation2 + $0x44] sm:$0xf] %v76
    %93 = vst [vmem:[#allocation2 + $0x4c] sm:$0xf] %v77
    %94 = vst [vmem:[#allocation2 + $0x54] sm:$0xf] %v78
    %95 = vst [vmem:[#allocation2 + $0x5c] sm:$0xf] %v79
    %96 = vst [vmem:[#allocation2 + $0x64] sm:$0xf] %v80
    %97 = vst [vmem:[#allocation2 + $0x6c] sm:$0xf] %v81
    %98 = vst [vmem:[#allocation2 + $0x74] sm:$0xf] %v82
    %99 = vst [vmem:[#allocation2 + $0x7c] sm:$0xf] %v83
    %v116 = vunpack.c.l.b16 %v52
    %v117 = vunpack.c.l.b16 %v53
    %v118 = vunpack.c.l.b16 %v54
    %v119 = vunpack.c.l.b16 %v55
    %v120 = vunpack.c.l.b16 %v56
    %v121 = vunpack.c.l.b16 %v57
    %v122 = vunpack.c.l.b16 %v58
    %v123 = vunpack.c.l.b16 %v59
    %v124 = vunpack.c.l.b16 %v60
    %v125 = vunpack.c.l.b16 %v61
    %v126 = vunpack.c.l.b16 %v62
    %v127 = vunpack.c.l.b16 %v63
    %v128 = vunpack.c.l.b16 %v64
    %v129 = vunpack.c.l.b16 %v65
    %v130 = vunpack.c.l.b16 %v66
    %v131 = vunpack.c.l.b16 %v67
    %v132 = vpack.c.b16 %v117, %v116
    %v133 = vpack.c.b16 %v119, %v118
    %v134 = vpack.c.b16 %v121, %v120
    %v135 = vpack.c.b16 %v123, %v122
    %v136 = vpack.c.b16 %v125, %v124
    %v137 = vpack.c.b16 %v127, %v126
    %v138 = vpack.c.b16 %v129, %v128
    %v139 = vpack.c.b16 %v131, %v130
    %v164 = vunpack.c.l.b16 %v68
    %v165 = vunpack.c.l.b16 %v69
    %v166 = vunpack.c.l.b16 %v70
    %v167 = vunpack.c.l.b16 %v71
    %v168 = vunpack.c.l.b16 %v72
    %v169 = vunpack.c.l.b16 %v73
    %v170 = vunpack.c.l.b16 %v74
    %v171 = vunpack.c.l.b16 %v75
    %v172 = vunpack.c.l.b16 %v76
    %v173 = vunpack.c.l.b16 %v77
    %v174 = vunpack.c.l.b16 %v78
    %v175 = vunpack.c.l.b16 %v79
    %v176 = vunpack.c.l.b16 %v80
    %v177 = vunpack.c.l.b16 %v81
    %v178 = vunpack.c.l.b16 %v82
    %v179 = vunpack.c.l.b16 %v83
    %v180 = vpack.c.b16 %v165, %v164
    %v181 = vpack.c.b16 %v167, %v166
    %v182 = vpack.c.b16 %v169, %v168
    %v183 = vpack.c.b16 %v171, %v170
    %v184 = vpack.c.b16 %v173, %v172
    %v185 = vpack.c.b16 %v175, %v174
    %v186 = vpack.c.b16 %v177, %v176
    %v187 = vpack.c.b16 %v179, %v178
    %196 = vmatprep.subr.bf16.mxu0 0
    %197 = vmatpush1.bf16.msra.mxu0 %v187
    %198 = vmatprep.subr.bf16.mxu0 0
    %199 = vmatpush1.bf16.msra.mxu0 %v186
    %200 = vmatprep.subr.bf16.mxu0 0
    %201 = vmatpush1.bf16.msra.mxu0 %v185
    %202 = vmatprep.subr.bf16.mxu0 0
    %203 = vmatpush1.bf16.msra.mxu0 %v184
    %204 = vmatprep.subr.bf16.mxu0 0
    %205 = vmatpush1.bf16.msra.mxu0 %v183
    %206 = vmatprep.subr.bf16.mxu0 0
    %207 = vmatpush1.bf16.msra.mxu0 %v182
    %208 = vmatprep.subr.bf16.mxu0 0
    %209 = vmatpush1.bf16.msra.mxu0 %v181
    %210 = vmatprep.subr.bf16.mxu0 0
    %211 = vmatpush1.bf16.msra.mxu0 %v180
    %212 = vmatprep.subr.bf16.mxu0 0
    %213 = vmatpush2.bf16.msra.mxu0 0
    %214 = vmatprep.subr.bf16.mxu0 0
    %215 = vmatpush2.bf16.msra.mxu0 0
    %216 = vmatprep.subr.bf16.mxu0 0
    %217 = vmatpush2.bf16.msra.mxu0 0
    %218 = vmatprep.subr.bf16.mxu0 0
    %219 = vmatpush2.bf16.msra.mxu0 0
    %220 = vmatprep.subr.bf16.mxu0 0
    %221 = vmatpush2.bf16.msra.mxu0 0
    %222 = vmatprep.subr.bf16.mxu0 0
    %223 = vmatpush2.bf16.msra.mxu0 0
    %224 = vmatprep.subr.bf16.mxu0 0
    %225 = vmatpush2.bf16.msra.mxu0 0
    %226 = vmatprep.subr.bf16.mxu0 0
    %227 = vmatpush2.bf16.msra.mxu0 0
    %228 = vmatprep.mubr.bf16.mxu0 0
    %229 = vmatmul.mubr.bf16.gmra.mxu0 %v132
    %v230 = vpop.f32.mrf.mxu0
    %v231 = vadd.f32 0.0, %v230
    %v232 = vpop.f32.mrf.mxu0
    %v233 = vpop.f32.mrf.mxu0
    %v234 = vadd.f32 0.0, %v233
    %v235 = vpop.f32.mrf.mxu0
    %236 = vmatprep.mubr.bf16.mxu0 0
    %237 = vmatmul.mubr.bf16.gmra.mxu0 %v133
    %v238 = vpop.f32.mrf.mxu0
    %v239 = vadd.f32 0.0, %v238
    %v240 = vpop.f32.mrf.mxu0
    %v241 = vpop.f32.mrf.mxu0
    %v242 = vadd.f32 0.0, %v241
    %v243 = vpop.f32.mrf.mxu0
    %244 = vmatprep.mubr.bf16.mxu0 0
    %245 = vmatmul.mubr.bf16.gmra.mxu0 %v134
    %v246 = vpop.f32.mrf.mxu0
    %v247 = vadd.f32 0.0, %v246
    %v248 = vpop.f32.mrf.mxu0
    %v249 = vpop.f32.mrf.mxu0
    %v250 = vadd.f32 0.0, %v249
    %v251 = vpop.f32.mrf.mxu0
    %252 = vmatprep.mubr.bf16.mxu0 0
    %253 = vmatmul.mubr.bf16.gmra.mxu0 %v135
    %v254 = vpop.f32.mrf.mxu0
    %v255 = vadd.f32 0.0, %v254
    %v256 = vpop.f32.mrf.mxu0
    %v257 = vpop.f32.mrf.mxu0
    %v258 = vadd.f32 0.0, %v257
    %v259 = vpop.f32.mrf.mxu0
    %260 = vmatprep.mubr.bf16.mxu0 0
    %261 = vmatmul.mubr.bf16.gmra.mxu0 %v136
    %v262 = vpop.f32.mrf.mxu0
    %v263 = vadd.f32 0.0, %v262
    %v264 = vpop.f32.mrf.mxu0
    %v265 = vpop.f32.mrf.mxu0
    %v266 = vadd.f32 0.0, %v265
    %v267 = vpop.f32.mrf.mxu0
    %268 = vmatprep.mubr.bf16.mxu0 0
    %269 = vmatmul.mubr.bf16.gmra.mxu0 %v137
    %v270 = vpop.f32.mrf.mxu0
    %v271 = vadd.f32 0.0, %v270
    %v272 = vpop.f32.mrf.mxu0
    %v273 = vpop.f32.mrf.mxu0
    %v274 = vadd.f32 0.0, %v273
    %v275 = vpop.f32.mrf.mxu0
    %276 = vmatprep.mubr.bf16.mxu0 0
    %277 = vmatmul.mubr.bf16.gmra.mxu0 %v138
    %v278 = vpop.f32.mrf.mxu0
    %v279 = vadd.f32 0.0, %v278
    %v280 = vpop.f32.mrf.mxu0
    %v281 = vpop.f32.mrf.mxu0
    %v282 = vadd.f32 0.0, %v281
    %v283 = vpop.f32.mrf.mxu0
    %284 = vmatprep.mubr.bf16.mxu0 0
    %285 = vmatmul.mubr.bf16.gmra.mxu0 %v139
    %v286 = vpop.f32.mrf.mxu0
    %v287 = vadd.f32 0.0, %v286
    %v288 = vpop.f32.mrf.mxu0
    %v289 = vpop.f32.mrf.mxu0
    %v290 = vadd.f32 0.0, %v289
    %v291 = vpop.f32.mrf.mxu0
    %292 = vdwg.mxu0
    %v293 = vpack.c.bf16 %v234, %v231
    %v294 = vpack.c.bf16 %v242, %v239
    %v295 = vpack.c.bf16 %v250, %v247
    %v296 = vpack.c.bf16 %v258, %v255
    %v297 = vpack.c.bf16 %v266, %v263
    %v298 = vpack.c.bf16 %v274, %v271
    %v299 = vpack.c.bf16 %v282, %v279
    %v300 = vpack.c.bf16 %v290, %v287
    %v309 = vunpack.c.l.b16 %v293
    %v310 = vunpack.c.h.b16 %v293
    %v311 = vunpack.c.l.b16 %v294
    %v312 = vunpack.c.h.b16 %v294
    %v313 = vunpack.c.l.b16 %v295
    %v314 = vunpack.c.h.b16 %v295
    %v315 = vunpack.c.l.b16 %v296
    %v316 = vunpack.c.h.b16 %v296
    %v317 = vunpack.c.l.b16 %v297
    %v318 = vunpack.c.h.b16 %v297
    %v319 = vunpack.c.l.b16 %v298
    %v320 = vunpack.c.h.b16 %v298
    %v321 = vunpack.c.l.b16 %v299
    %v322 = vunpack.c.h.b16 %v299
    %v323 = vunpack.c.l.b16 %v300
    %v324 = vunpack.c.h.b16 %v300
    %v325 = vpack.c.b16 %v309, %v309
    %v326 = vpack.c.b16 %v310, %v310
    %v327 = vpack.c.b16 %v311, %v311
    %v328 = vpack.c.b16 %v312, %v312
    %v329 = vpack.c.b16 %v313, %v313
    %v330 = vpack.c.b16 %v314, %v314
    %v331 = vpack.c.b16 %v315, %v315
    %v332 = vpack.c.b16 %v316, %v316
    %v333 = vpack.c.b16 %v317, %v317
    %v334 = vpack.c.b16 %v318, %v318
    %v335 = vpack.c.b16 %v319, %v319
    %v336 = vpack.c.b16 %v320, %v320
    %v337 = vpack.c.b16 %v321, %v321
    %v338 = vpack.c.b16 %v322, %v322
    %v339 = vpack.c.b16 %v323, %v323
    %v340 = vpack.c.b16 %v324, %v324
    %357 = vst [vmem:[#allocation2] sm:$0xf] %v325
    %358 = vst [vmem:[#allocation2 + $0x8] sm:$0xf] %v326
    %359 = vst [vmem:[#allocation2 + $0x10] sm:$0xf] %v327
    %360 = vst [vmem:[#allocation2 + $0x18] sm:$0xf] %v328
    %361 = vst [vmem:[#allocation2 + $0x20] sm:$0xf] %v329
    %362 = vst [vmem:[#allocation2 + $0x28] sm:$0xf] %v330
    %363 = vst [vmem:[#allocation2 + $0x30] sm:$0xf] %v331
    %364 = vst [vmem:[#allocation2 + $0x38] sm:$0xf] %v332
    %365 = vst [vmem:[#allocation2 + $0x40] sm:$0xf] %v333
    %366 = vst [vmem:[#allocation2 + $0x48] sm:$0xf] %v334
    %367 = vst [vmem:[#allocation2 + $0x50] sm:$0xf] %v335
    %368 = vst [vmem:[#allocation2 + $0x58] sm:$0xf] %v336
    %369 = vst [vmem:[#allocation2 + $0x60] sm:$0xf] %v337
    %370 = vst [vmem:[#allocation2 + $0x68] sm:$0xf] %v338
    %371 = vst [vmem:[#allocation2 + $0x70] sm:$0xf] %v339
    %372 = vst [vmem:[#allocation2 + $0x78] sm:$0xf] %v340
    %v373 = vld [vmem:[#allocation2] sm:$0xff]
    %v374 = vld [vmem:[#allocation2 + $0x8] sm:$0xff]
    %v375 = vld [vmem:[#allocation2 + $0x10] sm:$0xff]
    %v376 = vld [vmem:[#allocation2 + $0x18] sm:$0xff]
    %v377 = vld [vmem:[#allocation2 + $0x20] sm:$0xff]
    %v378 = vld [vmem:[#allocation2 + $0x28] sm:$0xff]
    %v379 = vld [vmem:[#allocation2 + $0x30] sm:$0xff]
    %v380 = vld [vmem:[#allocation2 + $0x38] sm:$0xff]
    %v381 = vld [vmem:[#allocation2 + $0x40] sm:$0xff]
    %v382 = vld [vmem:[#allocation2 + $0x48] sm:$0xff]
    %v383 = vld [vmem:[#allocation2 + $0x50] sm:$0xff]
    %v384 = vld [vmem:[#allocation2 + $0x58] sm:$0xff]
    %v385 = vld [vmem:[#allocation2 + $0x60] sm:$0xff]
    %v386 = vld [vmem:[#allocation2 + $0x68] sm:$0xff]
    %v387 = vld [vmem:[#allocation2 + $0x70] sm:$0xff]
    %v388 = vld [vmem:[#allocation2 + $0x78] sm:$0xff]
    %v389 = vld [vmem:[%s2] sm:$0xf]
    %v390 = vld [vmem:[%s2 + $0x4] sm:$0xf]
    %v391 = vld [vmem:[%s2 + $0x8] sm:$0xf]
    %v392 = vld [vmem:[%s2 + $0xc] sm:$0xf]
    %v393 = vld [vmem:[%s2 + $0x10] sm:$0xf]
    %v394 = vld [vmem:[%s2 + $0x14] sm:$0xf]
    %v395 = vld [vmem:[%s2 + $0x18] sm:$0xf]
    %v396 = vld [vmem:[%s2 + $0x1c] sm:$0xf]
    %v397 = vld [vmem:[%s2 + $0x20] sm:$0xf]
    %v398 = vld [vmem:[%s2 + $0x24] sm:$0xf]
    %v399 = vld [vmem:[%s2 + $0x28] sm:$0xf]
    %v400 = vld [vmem:[%s2 + $0x2c] sm:$0xf]
    %v401 = vld [vmem:[%s2 + $0x30] sm:$0xf]
    %v402 = vld [vmem:[%s2 + $0x34] sm:$0xf]
    %v403 = vld [vmem:[%s2 + $0x38] sm:$0xf]
    %v404 = vld [vmem:[%s2 + $0x3c] sm:$0xf]
    %v405 = vld [vmem:[%s2 + $0x40] sm:$0xf]
    %v406 = vld [vmem:[%s2 + $0x44] sm:$0xf]
    %v407 = vld [vmem:[%s2 + $0x48] sm:$0xf]
    %v408 = vld [vmem:[%s2 + $0x4c] sm:$0xf]
    %v409 = vld [vmem:[%s2 + $0x50] sm:$0xf]
    %v410 = vld [vmem:[%s2 + $0x54] sm:$0xf]
    %v411 = vld [vmem:[%s2 + $0x58] sm:$0xf]
    %v412 = vld [vmem:[%s2 + $0x5c] sm:$0xf]
    %v413 = vld [vmem:[%s2 + $0x60] sm:$0xf]
    %v414 = vld [vmem:[%s2 + $0x64] sm:$0xf]
    %v415 = vld [vmem:[%s2 + $0x68] sm:$0xf]
    %v416 = vld [vmem:[%s2 + $0x6c] sm:$0xf]
    %v417 = vld [vmem:[%s2 + $0x70] sm:$0xf]
    %v418 = vld [vmem:[%s2 + $0x74] sm:$0xf]
    %v419 = vld [vmem:[%s2 + $0x78] sm:$0xf]
    %v420 = vld [vmem:[%s2 + $0x7c] sm:$0xf]
    %v421 = vld [vmem:[%s3] sm:$0x1]
    %v423 = vlaneseq
    %v424 = vshrl.u32 %v423, 7
    %v425 = vsub.s32 0, %v424
    %v426 = vrot.slane %v421, %v425
    %v444 = vunpack.c.l.b16 %v373
    %v445 = vunpack.c.h.b16 %v373
    %v446 = vunpack.c.l.b16 %v374
    %v447 = vunpack.c.h.b16 %v374
    %v448 = vunpack.c.l.b16 %v375
    %v449 = vunpack.c.h.b16 %v375
    %v450 = vunpack.c.l.b16 %v376
    %v451 = vunpack.c.h.b16 %v376
    %v452 = vunpack.c.l.b16 %v377
    %v453 = vunpack.c.h.b16 %v377
    %v454 = vunpack.c.l.b16 %v378
    %v455 = vunpack.c.h.b16 %v378
    %v456 = vunpack.c.l.b16 %v379
    %v457 = vunpack.c.h.b16 %v379
    %v458 = vunpack.c.l.b16 %v380
    %v459 = vunpack.c.h.b16 %v380
    %v460 = vunpack.c.l.b16 %v381
    %v461 = vunpack.c.h.b16 %v381
    %v462 = vunpack.c.l.b16 %v382
    %v463 = vunpack.c.h.b16 %v382
    %v464 = vunpack.c.l.b16 %v383
    %v465 = vunpack.c.h.b16 %v383
    %v466 = vunpack.c.l.b16 %v384
    %v467 = vunpack.c.h.b16 %v384
    %v468 = vunpack.c.l.b16 %v385
    %v469 = vunpack.c.h.b16 %v385
    %v470 = vunpack.c.l.b16 %v386
    %v471 = vunpack.c.h.b16 %v386
    %v472 = vunpack.c.l.b16 %v387
    %v473 = vunpack.c.h.b16 %v387
    %v474 = vunpack.c.l.b16 %v388
    %v475 = vunpack.c.h.b16 %v388
    %v476 = vpack.c.b16 %v446, %v444
    %v477 = vpack.c.b16 %v447, %v445
    %v478 = vpack.c.b16 %v450, %v448
    %v479 = vpack.c.b16 %v451, %v449
    %v480 = vpack.c.b16 %v454, %v452
    %v481 = vpack.c.b16 %v455, %v453
    %v482 = vpack.c.b16 %v458, %v456
    %v483 = vpack.c.b16 %v459, %v457
    %v484 = vpack.c.b16 %v462, %v460
    %v485 = vpack.c.b16 %v463, %v461
    %v486 = vpack.c.b16 %v466, %v464
    %v487 = vpack.c.b16 %v467, %v465
    %v488 = vpack.c.b16 %v470, %v468
    %v489 = vpack.c.b16 %v471, %v469
    %v490 = vpack.c.b16 %v474, %v472
    %v491 = vpack.c.b16 %v475, %v473
    %v540 = vunpack.c.l.b16 %v389
    %v541 = vunpack.c.l.b16 %v390
    %v542 = vunpack.c.l.b16 %v391
    %v543 = vunpack.c.l.b16 %v392
    %v544 = vunpack.c.l.b16 %v393
    %v545 = vunpack.c.l.b16 %v394
    %v546 = vunpack.c.l.b16 %v395
    %v547 = vunpack.c.l.b16 %v396
    %v548 = vunpack.c.l.b16 %v397
    %v549 = vunpack.c.l.b16 %v398
    %v550 = vunpack.c.l.b16 %v399
    %v551 = vunpack.c.l.b16 %v400
    %v552 = vunpack.c.l.b16 %v401
    %v553 = vunpack.c.l.b16 %v402
    %v554 = vunpack.c.l.b16 %v403
    %v555 = vunpack.c.l.b16 %v404
    %v556 = vunpack.c.l.b16 %v405
    %v557 = vunpack.c.l.b16 %v406
    %v558 = vunpack.c.l.b16 %v407
    %v559 = vunpack.c.l.b16 %v408
    %v560 = vunpack.c.l.b16 %v409
    %v561 = vunpack.c.l.b16 %v410
    %v562 = vunpack.c.l.b16 %v411
    %v563 = vunpack.c.l.b16 %v412
    %v564 = vunpack.c.l.b16 %v413
    %v565 = vunpack.c.l.b16 %v414
    %v566 = vunpack.c.l.b16 %v415
    %v567 = vunpack.c.l.b16 %v416
    %v568 = vunpack.c.l.b16 %v417
    %v569 = vunpack.c.l.b16 %v418
    %v570 = vunpack.c.l.b16 %v419
    %v571 = vunpack.c.l.b16 %v420
    %v572 = vpack.c.b16 %v541, %v540
    %v573 = vpack.c.b16 %v543, %v542
    %v574 = vpack.c.b16 %v545, %v544
    %v575 = vpack.c.b16 %v547, %v546
    %v576 = vpack.c.b16 %v549, %v548
    %v577 = vpack.c.b16 %v551, %v550
    %v578 = vpack.c.b16 %v553, %v552
    %v579 = vpack.c.b16 %v555, %v554
    %v580 = vpack.c.b16 %v557, %v556
    %v581 = vpack.c.b16 %v559, %v558
    %v582 = vpack.c.b16 %v561, %v560
    %v583 = vpack.c.b16 %v563, %v562
    %v584 = vpack.c.b16 %v565, %v564
    %v585 = vpack.c.b16 %v567, %v566
    %v586 = vpack.c.b16 %v569, %v568
    %v587 = vpack.c.b16 %v571, %v570
    %604 = vmatprep.subr.bf16.mxu0 0
    %605 = vmatpush1.bf16.msra.mxu0 %v579
    %606 = vmatprep.subr.bf16.mxu0 0
    %607 = vmatpush1.bf16.msra.mxu0 %v578
    %608 = vmatprep.subr.bf16.mxu0 0
    %609 = vmatpush1.bf16.msra.mxu0 %v577
    %610 = vmatprep.subr.bf16.mxu0 0
    %611 = vmatpush1.bf16.msra.mxu0 %v576
    %612 = vmatprep.subr.bf16.mxu0 0
    %613 = vmatpush1.bf16.msra.mxu0 %v575
    %614 = vmatprep.subr.bf16.mxu0 0
    %615 = vmatpush1.bf16.msra.mxu0 %v574
    %616 = vmatprep.subr.bf16.mxu0 0
    %617 = vmatpush1.bf16.msra.mxu0 %v573
    %618 = vmatprep.subr.bf16.mxu0 0
    %619 = vmatpush1.bf16.msra.mxu0 %v572
    %620 = vmatprep.subr.bf16.mxu0 0
    %621 = vmatpush2.bf16.msra.mxu0 %v587
    %622 = vmatprep.subr.bf16.mxu0 0
    %623 = vmatpush2.bf16.msra.mxu0 %v586
    %624 = vmatprep.subr.bf16.mxu0 0
    %625 = vmatpush2.bf16.msra.mxu0 %v585
    %626 = vmatprep.subr.bf16.mxu0 0
    %627 = vmatpush2.bf16.msra.mxu0 %v584
    %628 = vmatprep.subr.bf16.mxu0 0
    %629 = vmatpush2.bf16.msra.mxu0 %v583
    %630 = vmatprep.subr.bf16.mxu0 0
    %631 = vmatpush2.bf16.msra.mxu0 %v582
    %632 = vmatprep.subr.bf16.mxu0 0
    %633 = vmatpush2.bf16.msra.mxu0 %v581
    %634 = vmatprep.subr.bf16.mxu0 0
    %635 = vmatpush2.bf16.msra.mxu0 %v580
    %636 = vmatprep.mubr.bf16.mxu0 %v477
    %637 = vmatmul.mubr.bf16.gmra.mxu0 %v476
    %v638 = vpop.f32.mrf.mxu0
    %v639 = vadd.f32 %v426, %v638
    %v640 = vpop.f32.mrf.mxu0
    %v641 = vpop.f32.mrf.mxu0
    %v642 = vadd.f32 %v426, %v641
    %v643 = vpop.f32.mrf.mxu0
    %644 = vmatprep.mubr.bf16.mxu0 %v479
    %645 = vmatmul.mubr.bf16.gmra.mxu0 %v478
    %v646 = vpop.f32.mrf.mxu0
    %v647 = vadd.f32 %v426, %v646
    %v648 = vpop.f32.mrf.mxu0
    %v649 = vpop.f32.mrf.mxu0
    %v650 = vadd.f32 %v426, %v649
    %v651 = vpop.f32.mrf.mxu0
    %652 = vmatprep.mubr.bf16.mxu0 %v481
    %653 = vmatmul.mubr.bf16.gmra.mxu0 %v480
    %v654 = vpop.f32.mrf.mxu0
    %v655 = vadd.f32 %v426, %v654
    %v656 = vpop.f32.mrf.mxu0
    %v657 = vpop.f32.mrf.mxu0
    %v658 = vadd.f32 %v426, %v657
    %v659 = vpop.f32.mrf.mxu0
    %660 = vmatprep.mubr.bf16.mxu0 %v483
    %661 = vmatmul.mubr.bf16.gmra.mxu0 %v482
    %v662 = vpop.f32.mrf.mxu0
    %v663 = vadd.f32 %v426, %v662
    %v664 = vpop.f32.mrf.mxu0
    %v665 = vpop.f32.mrf.mxu0
    %v666 = vadd.f32 %v426, %v665
    %v667 = vpop.f32.mrf.mxu0
    %668 = vmatprep.mubr.bf16.mxu0 %v485
    %669 = vmatmul.mubr.bf16.gmra.mxu0 %v484
    %v670 = vpop.f32.mrf.mxu0
    %v671 = vadd.f32 %v426, %v670
    %v672 = vpop.f32.mrf.mxu0
    %v673 = vpop.f32.mrf.mxu0
    %v674 = vadd.f32 %v426, %v673
    %v675 = vpop.f32.mrf.mxu0
    %676 = vmatprep.mubr.bf16.mxu0 %v487
    %677 = vmatmul.mubr.bf16.gmra.mxu0 %v486
    %v678 = vpop.f32.mrf.mxu0
    %v679 = vadd.f32 %v426, %v678
    %v680 = vpop.f32.mrf.mxu0
    %v681 = vpop.f32.mrf.mxu0
    %v682 = vadd.f32 %v426, %v681
    %v683 = vpop.f32.mrf.mxu0
    %684 = vmatprep.mubr.bf16.mxu0 %v489
    %685 = vmatmul.mubr.bf16.gmra.mxu0 %v488
    %v686 = vpop.f32.mrf.mxu0
    %v687 = vadd.f32 %v426, %v686
    %v688 = vpop.f32.mrf.mxu0
    %v689 = vpop.f32.mrf.mxu0
    %v690 = vadd.f32 %v426, %v689
    %v691 = vpop.f32.mrf.mxu0
    %692 = vmatprep.mubr.bf16.mxu0 %v491
    %693 = vmatmul.mubr.bf16.gmra.mxu0 %v490
    %v694 = vpop.f32.mrf.mxu0
    %v695 = vadd.f32 %v426, %v694
    %v696 = vpop.f32.mrf.mxu0
    %v697 = vpop.f32.mrf.mxu0
    %v698 = vadd.f32 %v426, %v697
    %v699 = vpop.f32.mrf.mxu0
    %700 = vdwg.mxu0
    %v701 = vmax.f32 %v639, 0.0
    %v702 = vmax.f32 %v642, 0.0
    %v703 = vmax.f32 %v647, 0.0
    %v704 = vmax.f32 %v650, 0.0
    %v705 = vmax.f32 %v655, 0.0
    %v706 = vmax.f32 %v658, 0.0
    %v707 = vmax.f32 %v663, 0.0
    %v708 = vmax.f32 %v666, 0.0
    %v709 = vmax.f32 %v671, 0.0
    %v710 = vmax.f32 %v674, 0.0
    %v711 = vmax.f32 %v679, 0.0
    %v712 = vmax.f32 %v682, 0.0
    %v713 = vmax.f32 %v687, 0.0
    %v714 = vmax.f32 %v690, 0.0
    %v715 = vmax.f32 %v695, 0.0
    %v716 = vmax.f32 %v698, 0.0
    %v717 = vpack.c.bf16 %v702, %v701
    %v718 = vpack.c.bf16 %v704, %v703
    %v719 = vpack.c.bf16 %v706, %v705
    %v720 = vpack.c.bf16 %v708, %v707
    %v721 = vpack.c.bf16 %v710, %v709
    %v722 = vpack.c.bf16 %v712, %v711
    %v723 = vpack.c.bf16 %v714, %v713
    %v724 = vpack.c.bf16 %v716, %v715
    %725 = vmatprep.subr.bf16.mxu0 0
    %726 = vmatpush1.bf16.msra.mxu0 %v724
    %727 = vmatprep.subr.bf16.mxu0 0
    %728 = vmatpush1.bf16.msra.mxu0 %v723
    %729 = vmatprep.subr.bf16.mxu0 0
    %730 = vmatpush1.bf16.msra.mxu0 %v722
    %731 = vmatprep.subr.bf16.mxu0 0
    %732 = vmatpush1.bf16.msra.mxu0 %v721
    %733 = vmatprep.subr.bf16.mxu0 0
    %734 = vmatpush1.bf16.msra.mxu0 %v720
    %735 = vmatprep.subr.bf16.mxu0 0
    %736 = vmatpush1.bf16.msra.mxu0 %v719
    %737 = vmatprep.subr.bf16.mxu0 0
    %738 = vmatpush1.bf16.msra.mxu0 %v718
    %739 = vmatprep.subr.bf16.mxu0 0
    %740 = vmatpush1.bf16.msra.mxu0 %v717
    %741 = vmatprep.subr.bf16.mxu0 0
    %742 = vmatpush2.bf16.msra.mxu0 0
    %743 = vmatprep.subr.bf16.mxu0 0
    %744 = vmatpush2.bf16.msra.mxu0 0
    %745 = vmatprep.subr.bf16.mxu0 0
    %746 = vmatpush2.bf16.msra.mxu0 0
    %747 = vmatprep.subr.bf16.mxu0 0
    %748 = vmatpush2.bf16.msra.mxu0 0
    %749 = vmatprep.subr.bf16.mxu0 0
    %750 = vmatpush2.bf16.msra.mxu0 0
    %751 = vmatprep.subr.bf16.mxu0 0
    %752 = vmatpush2.bf16.msra.mxu0 0
    %753 = vmatprep.subr.bf16.mxu0 0
    %754 = vmatpush2.bf16.msra.mxu0 0
    %755 = vmatprep.subr.bf16.mxu0 0
    %756 = vmatpush2.bf16.msra.mxu0 0
    %757 = vmatprep.mubr.bf16.mxu0 0
    %758 = vmatmul.mubr.bf16.gmra.mxu0 %v132
    %v759 = vpop.f32.mrf.mxu0
    %v760 = vadd.f32 0.0, %v759
    %v761 = vpop.f32.mrf.mxu0
    %v762 = vpop.f32.mrf.mxu0
    %v763 = vadd.f32 0.0, %v762
    %v764 = vpop.f32.mrf.mxu0
    %765 = vmatprep.mubr.bf16.mxu0 0
    %766 = vmatmul.mubr.bf16.gmra.mxu0 %v133
    %v767 = vpop.f32.mrf.mxu0
    %v768 = vadd.f32 0.0, %v767
    %v769 = vpop.f32.mrf.mxu0
    %v770 = vpop.f32.mrf.mxu0
    %v771 = vadd.f32 0.0, %v770
    %v772 = vpop.f32.mrf.mxu0
    %773 = vmatprep.mubr.bf16.mxu0 0
    %774 = vmatmul.mubr.bf16.gmra.mxu0 %v134
    %v775 = vpop.f32.mrf.mxu0
    %v776 = vadd.f32 0.0, %v775
    %v777 = vpop.f32.mrf.mxu0
    %v778 = vpop.f32.mrf.mxu0
    %v779 = vadd.f32 0.0, %v778
    %v780 = vpop.f32.mrf.mxu0
    %781 = vmatprep.mubr.bf16.mxu0 0
    %782 = vmatmul.mubr.bf16.gmra.mxu0 %v135
    %v783 = vpop.f32.mrf.mxu0
    %v784 = vadd.f32 0.0, %v783
    %v785 = vpop.f32.mrf.mxu0
    %v786 = vpop.f32.mrf.mxu0
    %v787 = vadd.f32 0.0, %v786
    %v788 = vpop.f32.mrf.mxu0
    %789 = vmatprep.mubr.bf16.mxu0 0
    %790 = vmatmul.mubr.bf16.gmra.mxu0 %v136
    %v791 = vpop.f32.mrf.mxu0
    %v792 = vadd.f32 0.0, %v791
    %v793 = vpop.f32.mrf.mxu0
    %v794 = vpop.f32.mrf.mxu0
    %v795 = vadd.f32 0.0, %v794
    %v796 = vpop.f32.mrf.mxu0
    %797 = vmatprep.mubr.bf16.mxu0 0
    %798 = vmatmul.mubr.bf16.gmra.mxu0 %v137
    %v799 = vpop.f32.mrf.mxu0
    %v800 = vadd.f32 0.0, %v799
    %v801 = vpop.f32.mrf.mxu0
    %v802 = vpop.f32.mrf.mxu0
    %v803 = vadd.f32 0.0, %v802
    %v804 = vpop.f32.mrf.mxu0
    %805 = vmatprep.mubr.bf16.mxu0 0
    %806 = vmatmul.mubr.bf16.gmra.mxu0 %v138
    %v807 = vpop.f32.mrf.mxu0
    %v808 = vadd.f32 0.0, %v807
    %v809 = vpop.f32.mrf.mxu0
    %v810 = vpop.f32.mrf.mxu0
    %v811 = vadd.f32 0.0, %v810
    %v812 = vpop.f32.mrf.mxu0
    %813 = vmatprep.mubr.bf16.mxu0 0
    %814 = vmatmul.mubr.bf16.gmra.mxu0 %v139
    %v815 = vpop.f32.mrf.mxu0
    %v816 = vadd.f32 0.0, %v815
    %v817 = vpop.f32.mrf.mxu0
    %v818 = vpop.f32.mrf.mxu0
    %v819 = vadd.f32 0.0, %v818
    %v820 = vpop.f32.mrf.mxu0
    %821 = vdwg.mxu0
    %v822 = vpack.c.bf16 %v763, %v760
    %v823 = vpack.c.bf16 %v771, %v768
    %v824 = vpack.c.bf16 %v779, %v776
    %v825 = vpack.c.bf16 %v787, %v784
    %v826 = vpack.c.bf16 %v795, %v792
    %v827 = vpack.c.bf16 %v803, %v800
    %v828 = vpack.c.bf16 %v811, %v808
    %v829 = vpack.c.bf16 %v819, %v816
    %v838 = vunpack.c.l.b16 %v822
    %v839 = vunpack.c.h.b16 %v822
    %v840 = vunpack.c.l.b16 %v823
    %v841 = vunpack.c.h.b16 %v823
    %v842 = vunpack.c.l.b16 %v824
    %v843 = vunpack.c.h.b16 %v824
    %v844 = vunpack.c.l.b16 %v825
    %v845 = vunpack.c.h.b16 %v825
    %v846 = vunpack.c.l.b16 %v826
    %v847 = vunpack.c.h.b16 %v826
    %v848 = vunpack.c.l.b16 %v827
    %v849 = vunpack.c.h.b16 %v827
    %v850 = vunpack.c.l.b16 %v828
    %v851 = vunpack.c.h.b16 %v828
    %v852 = vunpack.c.l.b16 %v829
    %v853 = vunpack.c.h.b16 %v829
    %v854 = vpack.c.b16 %v838, %v838
    %v855 = vpack.c.b16 %v839, %v839
    %v856 = vpack.c.b16 %v840, %v840
    %v857 = vpack.c.b16 %v841, %v841
    %v858 = vpack.c.b16 %v842, %v842
    %v859 = vpack.c.b16 %v843, %v843
    %v860 = vpack.c.b16 %v844, %v844
    %v861 = vpack.c.b16 %v845, %v845
    %v862 = vpack.c.b16 %v846, %v846
    %v863 = vpack.c.b16 %v847, %v847
    %v864 = vpack.c.b16 %v848, %v848
    %v865 = vpack.c.b16 %v849, %v849
    %v866 = vpack.c.b16 %v850, %v850
    %v867 = vpack.c.b16 %v851, %v851
    %v868 = vpack.c.b16 %v852, %v852
    %v869 = vpack.c.b16 %v853, %v853
    %886 = vst [vmem:[#allocation2] sm:$0xf] %v854
    %887 = vst [vmem:[#allocation2 + $0x8] sm:$0xf] %v855
    %888 = vst [vmem:[#allocation2 + $0x10] sm:$0xf] %v856
    %889 = vst [vmem:[#allocation2 + $0x18] sm:$0xf] %v857
    %890 = vst [vmem:[#allocation2 + $0x20] sm:$0xf] %v858
    %891 = vst [vmem:[#allocation2 + $0x28] sm:$0xf] %v859
    %892 = vst [vmem:[#allocation2 + $0x30] sm:$0xf] %v860
    %893 = vst [vmem:[#allocation2 + $0x38] sm:$0xf] %v861
    %894 = vst [vmem:[#allocation2 + $0x40] sm:$0xf] %v862
    %895 = vst [vmem:[#allocation2 + $0x48] sm:$0xf] %v863
    %896 = vst [vmem:[#allocation2 + $0x50] sm:$0xf] %v864
    %897 = vst [vmem:[#allocation2 + $0x58] sm:$0xf] %v865
    %898 = vst [vmem:[#allocation2 + $0x60] sm:$0xf] %v866
    %899 = vst [vmem:[#allocation2 + $0x68] sm:$0xf] %v867
    %900 = vst [vmem:[#allocation2 + $0x70] sm:$0xf] %v868
    %901 = vst [vmem:[#allocation2 + $0x78] sm:$0xf] %v869
    %v910 = vunpack.c.l.b16 %v717
    %v911 = vunpack.c.h.b16 %v717
    %v912 = vunpack.c.l.b16 %v718
    %v913 = vunpack.c.h.b16 %v718
    %v914 = vunpack.c.l.b16 %v719
    %v915 = vunpack.c.h.b16 %v719
    %v916 = vunpack.c.l.b16 %v720
    %v917 = vunpack.c.h.b16 %v720
    %v918 = vunpack.c.l.b16 %v721
    %v919 = vunpack.c.h.b16 %v721
    %v920 = vunpack.c.l.b16 %v722
    %v921 = vunpack.c.h.b16 %v722
    %v922 = vunpack.c.l.b16 %v723
    %v923 = vunpack.c.h.b16 %v723
    %v924 = vunpack.c.l.b16 %v724
    %v925 = vunpack.c.h.b16 %v724
    %v926 = vpack.c.b16 %v910, %v910
    %v927 = vpack.c.b16 %v911, %v911
    %v928 = vpack.c.b16 %v912, %v912
    %v929 = vpack.c.b16 %v913, %v913
    %v930 = vpack.c.b16 %v914, %v914
    %v931 = vpack.c.b16 %v915, %v915
    %v932 = vpack.c.b16 %v916, %v916
    %v933 = vpack.c.b16 %v917, %v917
    %v934 = vpack.c.b16 %v918, %v918
    %v935 = vpack.c.b16 %v919, %v919
    %v936 = vpack.c.b16 %v920, %v920
    %v937 = vpack.c.b16 %v921, %v921
    %v938 = vpack.c.b16 %v922, %v922
    %v939 = vpack.c.b16 %v923, %v923
    %v940 = vpack.c.b16 %v924, %v924
    %v941 = vpack.c.b16 %v925, %v925
    %958 = vst [vmem:[#allocation2 + $0x4] sm:$0xf] %v926
    %959 = vst [vmem:[#allocation2 + $0xc] sm:$0xf] %v927
    %960 = vst [vmem:[#allocation2 + $0x14] sm:$0xf] %v928
    %961 = vst [vmem:[#allocation2 + $0x1c] sm:$0xf] %v929
    %962 = vst [vmem:[#allocation2 + $0x24] sm:$0xf] %v930
    %963 = vst [vmem:[#allocation2 + $0x2c] sm:$0xf] %v931
    %964 = vst [vmem:[#allocation2 + $0x34] sm:$0xf] %v932
    %965 = vst [vmem:[#allocation2 + $0x3c] sm:$0xf] %v933
    %966 = vst [vmem:[#allocation2 + $0x44] sm:$0xf] %v934
    %967 = vst [vmem:[#allocation2 + $0x4c] sm:$0xf] %v935
    %968 = vst [vmem:[#allocation2 + $0x54] sm:$0xf] %v936
    %969 = vst [vmem:[#allocation2 + $0x5c] sm:$0xf] %v937
    %970 = vst [vmem:[#allocation2 + $0x64] sm:$0xf] %v938
    %971 = vst [vmem:[#allocation2 + $0x6c] sm:$0xf] %v939
    %972 = vst [vmem:[#allocation2 + $0x74] sm:$0xf] %v940
    %973 = vst [vmem:[#allocation2 + $0x7c] sm:$0xf] %v941
    %v974 = vld [vmem:[#allocation2] sm:$0xff]
    %v975 = vld [vmem:[#allocation2 + $0x8] sm:$0xff]
    %v976 = vld [vmem:[#allocation2 + $0x10] sm:$0xff]
    %v977 = vld [vmem:[#allocation2 + $0x18] sm:$0xff]
    %v978 = vld [vmem:[#allocation2 + $0x20] sm:$0xff]
    %v979 = vld [vmem:[#allocation2 + $0x28] sm:$0xff]
    %v980 = vld [vmem:[#allocation2 + $0x30] sm:$0xff]
    %v981 = vld [vmem:[#allocation2 + $0x38] sm:$0xff]
    %v982 = vld [vmem:[#allocation2 + $0x40] sm:$0xff]
    %v983 = vld [vmem:[#allocation2 + $0x48] sm:$0xff]
    %v984 = vld [vmem:[#allocation2 + $0x50] sm:$0xff]
    %v985 = vld [vmem:[#allocation2 + $0x58] sm:$0xff]
    %v986 = vld [vmem:[#allocation2 + $0x60] sm:$0xff]
    %v987 = vld [vmem:[#allocation2 + $0x68] sm:$0xff]
    %v988 = vld [vmem:[#allocation2 + $0x70] sm:$0xff]
    %v989 = vld [vmem:[#allocation2 + $0x78] sm:$0xff]
    %v990 = vld [vmem:[#allocation5] sm:$0xf]
    %v991 = vld [vmem:[#allocation5 + $0x4] sm:$0xf]
    %v992 = vld [vmem:[#allocation5 + $0x8] sm:$0xf]
    %v993 = vld [vmem:[#allocation5 + $0xc] sm:$0xf]
    %v994 = vld [vmem:[#allocation5 + $0x10] sm:$0xf]
    %v995 = vld [vmem:[#allocation5 + $0x14] sm:$0xf]
    %v996 = vld [vmem:[#allocation5 + $0x18] sm:$0xf]
    %v997 = vld [vmem:[#allocation5 + $0x1c] sm:$0xf]
    %v998 = vld [vmem:[#allocation5 + $0x20] sm:$0xf]
    %v999 = vld [vmem:[#allocation5 + $0x24] sm:$0xf]
    %v1000 = vld [vmem:[#allocation5 + $0x28] sm:$0xf]
    %v1001 = vld [vmem:[#allocation5 + $0x2c] sm:$0xf]
    %v1002 = vld [vmem:[#allocation5 + $0x30] sm:$0xf]
    %v1003 = vld [vmem:[#allocation5 + $0x34] sm:$0xf]
    %v1004 = vld [vmem:[#allocation5 + $0x38] sm:$0xf]
    %v1005 = vld [vmem:[#allocation5 + $0x3c] sm:$0xf]
    %v1006 = vld [vmem:[#allocation5 + $0x40] sm:$0xf]
    %v1007 = vld [vmem:[#allocation5 + $0x44] sm:$0xf]
    %v1008 = vld [vmem:[#allocation5 + $0x48] sm:$0xf]
    %v1009 = vld [vmem:[#allocation5 + $0x4c] sm:$0xf]
    %v1010 = vld [vmem:[#allocation5 + $0x50] sm:$0xf]
    %v1011 = vld [vmem:[#allocation5 + $0x54] sm:$0xf]
    %v1012 = vld [vmem:[#allocation5 + $0x58] sm:$0xf]
    %v1013 = vld [vmem:[#allocation5 + $0x5c] sm:$0xf]
    %v1014 = vld [vmem:[#allocation5 + $0x60] sm:$0xf]
    %v1015 = vld [vmem:[#allocation5 + $0x64] sm:$0xf]
    %v1016 = vld [vmem:[#allocation5 + $0x68] sm:$0xf]
    %v1017 = vld [vmem:[#allocation5 + $0x6c] sm:$0xf]
    %v1018 = vld [vmem:[#allocation5 + $0x70] sm:$0xf]
    %v1019 = vld [vmem:[#allocation5 + $0x74] sm:$0xf]
    %v1020 = vld [vmem:[#allocation5 + $0x78] sm:$0xf]
    %v1021 = vld [vmem:[#allocation5 + $0x7c] sm:$0xf]
    %v1022 = vld [vmem:[%s5] sm:$0x1]
    %v1024 = vlaneseq
    %v1025 = vshrl.u32 %v1024, 7
    %v1026 = vsub.s32 0, %v1025
    %v1027 = vrot.slane %v1022, %v1026
    %v1045 = vunpack.c.l.b16 %v974
    %v1046 = vunpack.c.h.b16 %v974
    %v1047 = vunpack.c.l.b16 %v975
    %v1048 = vunpack.c.h.b16 %v975
    %v1049 = vunpack.c.l.b16 %v976
    %v1050 = vunpack.c.h.b16 %v976
    %v1051 = vunpack.c.l.b16 %v977
    %v1052 = vunpack.c.h.b16 %v977
    %v1053 = vunpack.c.l.b16 %v978
    %v1054 = vunpack.c.h.b16 %v978
    %v1055 = vunpack.c.l.b16 %v979
    %v1056 = vunpack.c.h.b16 %v979
    %v1057 = vunpack.c.l.b16 %v980
    %v1058 = vunpack.c.h.b16 %v980
    %v1059 = vunpack.c.l.b16 %v981
    %v1060 = vunpack.c.h.b16 %v981
    %v1061 = vunpack.c.l.b16 %v982
    %v1062 = vunpack.c.h.b16 %v982
    %v1063 = vunpack.c.l.b16 %v983
    %v1064 = vunpack.c.h.b16 %v983
    %v1065 = vunpack.c.l.b16 %v984
    %v1066 = vunpack.c.h.b16 %v984
    %v1067 = vunpack.c.l.b16 %v985
    %v1068 = vunpack.c.h.b16 %v985
    %v1069 = vunpack.c.l.b16 %v986
    %v1070 = vunpack.c.h.b16 %v986
    %v1071 = vunpack.c.l.b16 %v987
    %v1072 = vunpack.c.h.b16 %v987
    %v1073 = vunpack.c.l.b16 %v988
    %v1074 = vunpack.c.h.b16 %v988
    %v1075 = vunpack.c.l.b16 %v989
    %v1076 = vunpack.c.h.b16 %v989
    %v1077 = vpack.c.b16 %v1047, %v1045
    %v1078 = vpack.c.b16 %v1048, %v1046
    %v1079 = vpack.c.b16 %v1051, %v1049
    %v1080 = vpack.c.b16 %v1052, %v1050
    %v1081 = vpack.c.b16 %v1055, %v1053
    %v1082 = vpack.c.b16 %v1056, %v1054
    %v1083 = vpack.c.b16 %v1059, %v1057
    %v1084 = vpack.c.b16 %v1060, %v1058
    %v1085 = vpack.c.b16 %v1063, %v1061
    %v1086 = vpack.c.b16 %v1064, %v1062
    %v1087 = vpack.c.b16 %v1067, %v1065
    %v1088 = vpack.c.b16 %v1068, %v1066
    %v1089 = vpack.c.b16 %v1071, %v1069
    %v1090 = vpack.c.b16 %v1072, %v1070
    %v1091 = vpack.c.b16 %v1075, %v1073
    %v1092 = vpack.c.b16 %v1076, %v1074
    %v1141 = vunpack.c.l.b16 %v990
    %v1142 = vunpack.c.l.b16 %v991
    %v1143 = vunpack.c.l.b16 %v992
    %v1144 = vunpack.c.l.b16 %v993
    %v1145 = vunpack.c.l.b16 %v994
    %v1146 = vunpack.c.l.b16 %v995
    %v1147 = vunpack.c.l.b16 %v996
    %v1148 = vunpack.c.l.b16 %v997
    %v1149 = vunpack.c.l.b16 %v998
    %v1150 = vunpack.c.l.b16 %v999
    %v1151 = vunpack.c.l.b16 %v1000
    %v1152 = vunpack.c.l.b16 %v1001
    %v1153 = vunpack.c.l.b16 %v1002
    %v1154 = vunpack.c.l.b16 %v1003
    %v1155 = vunpack.c.l.b16 %v1004
    %v1156 = vunpack.c.l.b16 %v1005
    %v1157 = vunpack.c.l.b16 %v1006
    %v1158 = vunpack.c.l.b16 %v1007
    %v1159 = vunpack.c.l.b16 %v1008
    %v1160 = vunpack.c.l.b16 %v1009
    %v1161 = vunpack.c.l.b16 %v1010
    %v1162 = vunpack.c.l.b16 %v1011
    %v1163 = vunpack.c.l.b16 %v1012
    %v1164 = vunpack.c.l.b16 %v1013
    %v1165 = vunpack.c.l.b16 %v1014
    %v1166 = vunpack.c.l.b16 %v1015
    %v1167 = vunpack.c.l.b16 %v1016
    %v1168 = vunpack.c.l.b16 %v1017
    %v1169 = vunpack.c.l.b16 %v1018
    %v1170 = vunpack.c.l.b16 %v1019
    %v1171 = vunpack.c.l.b16 %v1020
    %v1172 = vunpack.c.l.b16 %v1021
    %v1173 = vpack.c.b16 %v1142, %v1141
    %v1174 = vpack.c.b16 %v1144, %v1143
    %v1175 = vpack.c.b16 %v1146, %v1145
    %v1176 = vpack.c.b16 %v1148, %v1147
    %v1177 = vpack.c.b16 %v1150, %v1149
    %v1178 = vpack.c.b16 %v1152, %v1151
    %v1179 = vpack.c.b16 %v1154, %v1153
    %v1180 = vpack.c.b16 %v1156, %v1155
    %v1181 = vpack.c.b16 %v1158, %v1157
    %v1182 = vpack.c.b16 %v1160, %v1159
    %v1183 = vpack.c.b16 %v1162, %v1161
    %v1184 = vpack.c.b16 %v1164, %v1163
    %v1185 = vpack.c.b16 %v1166, %v1165
    %v1186 = vpack.c.b16 %v1168, %v1167
    %v1187 = vpack.c.b16 %v1170, %v1169
    %v1188 = vpack.c.b16 %v1172, %v1171
    %1205 = vmatprep.subr.bf16.mxu0 0
    %1206 = vmatpush1.bf16.msra.mxu0 %v1180
    %1207 = vmatprep.subr.bf16.mxu0 0
    %1208 = vmatpush1.bf16.msra.mxu0 %v1179
    %1209 = vmatprep.subr.bf16.mxu0 0
    %1210 = vmatpush1.bf16.msra.mxu0 %v1178
    %1211 = vmatprep.subr.bf16.mxu0 0
    %1212 = vmatpush1.bf16.msra.mxu0 %v1177
    %1213 = vmatprep.subr.bf16.mxu0 0
    %1214 = vmatpush1.bf16.msra.mxu0 %v1176
    %1215 = vmatprep.subr.bf16.mxu0 0
    %1216 = vmatpush1.bf16.msra.mxu0 %v1175
    %1217 = vmatprep.subr.bf16.mxu0 0
    %1218 = vmatpush1.bf16.msra.mxu0 %v1174
    %1219 = vmatprep.subr.bf16.mxu0 0
    %1220 = vmatpush1.bf16.msra.mxu0 %v1173
    %1221 = vmatprep.subr.bf16.mxu0 0
    %1222 = vmatpush2.bf16.msra.mxu0 %v1188
    %1223 = vmatprep.subr.bf16.mxu0 0
    %1224 = vmatpush2.bf16.msra.mxu0 %v1187
    %1225 = vmatprep.subr.bf16.mxu0 0
    %1226 = vmatpush2.bf16.msra.mxu0 %v1186
    %1227 = vmatprep.subr.bf16.mxu0 0
    %1228 = vmatpush2.bf16.msra.mxu0 %v1185
    %1229 = vmatprep.subr.bf16.mxu0 0
    %1230 = vmatpush2.bf16.msra.mxu0 %v1184
    %1231 = vmatprep.subr.bf16.mxu0 0
    %1232 = vmatpush2.bf16.msra.mxu0 %v1183
    %1233 = vmatprep.subr.bf16.mxu0 0
    %1234 = vmatpush2.bf16.msra.mxu0 %v1182
    %1235 = vmatprep.subr.bf16.mxu0 0
    %1236 = vmatpush2.bf16.msra.mxu0 %v1181
    %1237 = vmatprep.mubr.bf16.mxu0 %v1078
    %1238 = vmatmul.mubr.bf16.gmra.mxu0 %v1077
    %v1239 = vpop.f32.mrf.mxu0
    %v1240 = vadd.f32 %v1027, %v1239
    %v1241 = vpop.f32.mrf.mxu0
    %v1242 = vpop.f32.mrf.mxu0
    %v1243 = vadd.f32 %v1027, %v1242
    %v1244 = vpop.f32.mrf.mxu0
    %1245 = vmatprep.mubr.bf16.mxu0 %v1080
    %1246 = vmatmul.mubr.bf16.gmra.mxu0 %v1079
    %v1247 = vpop.f32.mrf.mxu0
    %v1248 = vadd.f32 %v1027, %v1247
    %v1249 = vpop.f32.mrf.mxu0
    %v1250 = vpop.f32.mrf.mxu0
    %v1251 = vadd.f32 %v1027, %v1250
    %v1252 = vpop.f32.mrf.mxu0
    %1253 = vmatprep.mubr.bf16.mxu0 %v1082
    %1254 = vmatmul.mubr.bf16.gmra.mxu0 %v1081
    %v1255 = vpop.f32.mrf.mxu0
    %v1256 = vadd.f32 %v1027, %v1255
    %v1257 = vpop.f32.mrf.mxu0
    %v1258 = vpop.f32.mrf.mxu0
    %v1259 = vadd.f32 %v1027, %v1258
    %v1260 = vpop.f32.mrf.mxu0
    %1261 = vmatprep.mubr.bf16.mxu0 %v1084
    %1262 = vmatmul.mubr.bf16.gmra.mxu0 %v1083
    %v1263 = vpop.f32.mrf.mxu0
    %v1264 = vadd.f32 %v1027, %v1263
    %v1265 = vpop.f32.mrf.mxu0
    %v1266 = vpop.f32.mrf.mxu0
    %v1267 = vadd.f32 %v1027, %v1266
    %v1268 = vpop.f32.mrf.mxu0
    %1269 = vmatprep.mubr.bf16.mxu0 %v1086
    %1270 = vmatmul.mubr.bf16.gmra.mxu0 %v1085
    %v1271 = vpop.f32.mrf.mxu0
    %v1272 = vadd.f32 %v1027, %v1271
    %v1273 = vpop.f32.mrf.mxu0
    %v1274 = vpop.f32.mrf.mxu0
    %v1275 = vadd.f32 %v1027, %v1274
    %v1276 = vpop.f32.mrf.mxu0
    %1277 = vmatprep.mubr.bf16.mxu0 %v1088
    %1278 = vmatmul.mubr.bf16.gmra.mxu0 %v1087
    %v1279 = vpop.f32.mrf.mxu0
    %v1280 = vadd.f32 %v1027, %v1279
    %v1281 = vpop.f32.mrf.mxu0
    %v1282 = vpop.f32.mrf.mxu0
    %v1283 = vadd.f32 %v1027, %v1282
    %v1284 = vpop.f32.mrf.mxu0
    %1285 = vmatprep.mubr.bf16.mxu0 %v1090
    %1286 = vmatmul.mubr.bf16.gmra.mxu0 %v1089
    %v1287 = vpop.f32.mrf.mxu0
    %v1288 = vadd.f32 %v1027, %v1287
    %v1289 = vpop.f32.mrf.mxu0
    %v1290 = vpop.f32.mrf.mxu0
    %v1291 = vadd.f32 %v1027, %v1290
    %v1292 = vpop.f32.mrf.mxu0
    %1293 = vmatprep.mubr.bf16.mxu0 %v1092
    %1294 = vmatmul.mubr.bf16.gmra.mxu0 %v1091
    %v1295 = vpop.f32.mrf.mxu0
    %v1296 = vadd.f32 %v1027, %v1295
    %v1297 = vpop.f32.mrf.mxu0
    %v1298 = vpop.f32.mrf.mxu0
    %v1299 = vadd.f32 %v1027, %v1298
    %v1300 = vpop.f32.mrf.mxu0
    %1301 = vdwg.mxu0
    %v1302 = vpack.c.bf16 %v1243, %v1240
    %v1303 = vpack.c.bf16 %v1251, %v1248
    %v1304 = vpack.c.bf16 %v1259, %v1256
    %v1305 = vpack.c.bf16 %v1267, %v1264
    %v1306 = vpack.c.bf16 %v1275, %v1272
    %v1307 = vpack.c.bf16 %v1283, %v1280
    %v1308 = vpack.c.bf16 %v1291, %v1288
    %v1309 = vpack.c.bf16 %v1299, %v1296
    %v1318 = vunpack.c.l.b16 %v1302
    %v1319 = vunpack.c.h.b16 %v1302
    %v1320 = vunpack.c.l.b16 %v1303
    %v1321 = vunpack.c.h.b16 %v1303
    %v1322 = vunpack.c.l.b16 %v1304
    %v1323 = vunpack.c.h.b16 %v1304
    %v1324 = vunpack.c.l.b16 %v1305
    %v1325 = vunpack.c.h.b16 %v1305
    %v1326 = vunpack.c.l.b16 %v1306
    %v1327 = vunpack.c.h.b16 %v1306
    %v1328 = vunpack.c.l.b16 %v1307
    %v1329 = vunpack.c.h.b16 %v1307
    %v1330 = vunpack.c.l.b16 %v1308
    %v1331 = vunpack.c.h.b16 %v1308
    %v1332 = vunpack.c.l.b16 %v1309
    %v1333 = vunpack.c.h.b16 %v1309
    %v1334 = vpack.c.b16 %v1318, %v1318
    %v1335 = vpack.c.b16 %v1319, %v1319
    %v1336 = vpack.c.b16 %v1320, %v1320
    %v1337 = vpack.c.b16 %v1321, %v1321
    %v1338 = vpack.c.b16 %v1322, %v1322
    %v1339 = vpack.c.b16 %v1323, %v1323
    %v1340 = vpack.c.b16 %v1324, %v1324
    %v1341 = vpack.c.b16 %v1325, %v1325
    %v1342 = vpack.c.b16 %v1326, %v1326
    %v1343 = vpack.c.b16 %v1327, %v1327
    %v1344 = vpack.c.b16 %v1328, %v1328
    %v1345 = vpack.c.b16 %v1329, %v1329
    %v1346 = vpack.c.b16 %v1330, %v1330
    %v1347 = vpack.c.b16 %v1331, %v1331
    %v1348 = vpack.c.b16 %v1332, %v1332
    %v1349 = vpack.c.b16 %v1333, %v1333
    %1366 = vst [vmem:[%s6] sm:$0xf] %v1334
    %1367 = vst [vmem:[%s6 + $0x4] sm:$0xf] %v1335
    %1368 = vst [vmem:[%s6 + $0x8] sm:$0xf] %v1336
    %1369 = vst [vmem:[%s6 + $0xc] sm:$0xf] %v1337
    %1370 = vst [vmem:[%s6 + $0x10] sm:$0xf] %v1338
    %1371 = vst [vmem:[%s6 + $0x14] sm:$0xf] %v1339
    %1372 = vst [vmem:[%s6 + $0x18] sm:$0xf] %v1340
    %1373 = vst [vmem:[%s6 + $0x1c] sm:$0xf] %v1341
    %1374 = vst [vmem:[%s6 + $0x20] sm:$0xf] %v1342
    %1375 = vst [vmem:[%s6 + $0x24] sm:$0xf] %v1343
    %1376 = vst [vmem:[%s6 + $0x28] sm:$0xf] %v1344
    %1377 = vst [vmem:[%s6 + $0x2c] sm:$0xf] %v1345
    %1378 = vst [vmem:[%s6 + $0x30] sm:$0xf] %v1346
    %1379 = vst [vmem:[%s6 + $0x34] sm:$0xf] %v1347
    %1380 = vst [vmem:[%s6 + $0x38] sm:$0xf] %v1348
    %1381 = vst [vmem:[%s6 + $0x3c] sm:$0xf] %v1349
    // Predicated region
    $region34: #{graphsage_forward.1} parent=1 // pred_check
      _
    $region35: #{graphsage_forward.1} parent=1 // pred_check_branch
      %1383 = sbr.rel (0) target = $region37
    $region36: #{graphsage_forward.1} parent=1 // pred_region
      _
    $region37: #{graphsage_forward.1} parent=1 // pred_fallthru
      _
    // Predicated region
    $region38: #{graphsage_forward.1} parent=1 // pred_check
      _
    $region39: #{graphsage_forward.1} parent=1 // pred_check_branch
      %1385 = sbr.rel (0) target = $region41
    $region40: #{graphsage_forward.1} parent=1 // pred_region
      _
    $region41: #{graphsage_forward.1} parent=1 // pred_fallthru
      _
    %1386 = vsyncpa [#allocation4], 1
    %1387 = vsyncpa [#allocation6], 1

</llo_original>
